<compile_context>
chip_gen: v6e
topology: v6e:2x2x1
jax: 0.10.0
libtpu: 0.0.40
codegen_flags: <defaults>
</compile_context>

<pallas_src>
import numpy as np
import jax
import jax.numpy as jnp
from jax import lax
from jax.experimental import pallas as pl
from jax.experimental.pallas import tpu as pltpu


def _round_up(x: int, m: int) -> int:
    return ((x + m - 1) // m) * m


def make_pe_table(dim_model: int, max_len: int) -> jnp.ndarray:
    """Deterministic parameter setup (mirrors PositionalEncoding.__init__)."""
    position = np.arange(max_len, dtype=np.float32)[:, None]                      # (max_len, 1)
    div_term = np.exp(
        np.arange(0, dim_model, 2, dtype=np.float32) * -(np.log(10000.0) / dim_model)
    )                                                                              # (dim_model/2,)
    pe = np.zeros((max_len, dim_model), dtype=np.float32)
    pe[:, 0::2] = np.sin(position * div_term)
    pe[:, 1::2] = np.cos(position * div_term)
    return jnp.asarray(pe)


def _gather_rows_kernel(pos_ref, pe_hbm, out_ref, sem):
    # pos_ref : SMEM (n_pad,) int32        scalar-prefetched positions
    # pe_hbm  : HBM  (max_len, d_pad) f32  full table, no auto-DMA (pl.ANY)
    # out_ref : VMEM (tr, d_pad)           dense output tile (pipeline-managed)
    # sem     : DMA semaphore (shape (1,))
    tr = out_ref.shape[0]
    base = pl.program_id(0) * tr

    # Issue all row DMAs for this tile; they stay in flight concurrently.
    def issue(r, carry):
        p = pos_ref[base + r]
        pltpu.make_async_copy(
            pe_hbm.at[pl.ds(p, 1), :],
            out_ref.at[pl.ds(r, 1), :],
            sem.at[0],
        ).start()
        return carry

    lax.fori_loop(0, tr, issue, 0, unroll=8)

    # Drain: wait once per issued copy (all copies are the same size).
    def drain(r, carry):
        pltpu.make_async_copy(
            pe_hbm.at[pl.ds(0, 1), :],
            out_ref.at[pl.ds(0, 1), :],
            sem.at[0],
        ).wait()
        return carry

    lax.fori_loop(0, tr, drain, 0)


def _concrete_or_none(x):
    try:
        return np.asarray(x)
    except Exception:  # traced value (inside jit/vmap/...) -> not statically known
        return None


def positional_encoding_forward(pe: jnp.ndarray, pos: jnp.ndarray, *,
                                allow_fast_path: bool = True,
                                tile_rows: int = 256) -> jnp.ndarray:
    """Equivalent of PositionalEncoding.forward(pos). Returns (len(pos), dim_model)."""
    max_len, dim_model = pe.shape
    n = int(pos.shape[0])
    if n == 0:
        return jnp.zeros((0, dim_model), pe.dtype)

    # ---- contiguous-arange fast path (the common transformer use): plain slice.
    if allow_fast_path:
        pos_np = _concrete_or_none(pos)
        if pos_np is not None and pos_np.ndim == 1:
            pos_np = pos_np.astype(np.int64)
            if (np.all(np.diff(pos_np) == 1)
                    and pos_np[0] >= 0 and pos_np[-1] < max_len):
                start = int(pos_np[0])
                return lax.dynamic_slice(pe, (start, 0), (n, dim_model))

    # ---- general gather path (batched DMA gather kernel).
    # Clamp for DMA safety (PyTorch would raise on out-of-range; we clamp).
    pos_i32 = jnp.clip(pos.astype(jnp.int32), 0, max_len - 1)

    # Lane-dense layout: pad dim_model up to a multiple of 128.
    # (In a production module the padded table would be built once at init.)
    d_pad = _round_up(dim_model, 128)
    pe_use = pe if d_pad == dim_model else jnp.pad(pe, ((0, 0), (0, d_pad - dim_model)))

    # Sublane-dense tiles: tr rows per grid step (multiple of 8), n padded up to
    # a multiple of tr.  Padded rows gather pe[0] and are sliced off below.
    tr = max(8, _round_up(min(tile_rows, _round_up(n, 8)), 8))
    n_pad = _round_up(n, tr)
    pos_padded = jnp.pad(pos_i32, (0, n_pad - n))

    out = pl.pallas_call(
        _gather_rows_kernel,
        out_shape=jax.ShapeDtypeStruct((n_pad, d_pad), pe.dtype),
        grid_spec=pltpu.PrefetchScalarGridSpec(
            num_scalar_prefetch=1,
            grid=(n_pad // tr,),
            in_specs=[
                # pe stays in HBM; rows are fetched on demand by manual DMAs.
                pl.BlockSpec(memory_space=pl.ANY),
            ],
            out_specs=pl.BlockSpec((tr, d_pad), lambda i, pos_r: (i, 0)),
            scratch_shapes=[pltpu.SemaphoreType.DMA((1,))],
        ),
        compiler_params=pltpu.CompilerParams(
            dimension_semantics=("parallel",),  # tiles independent -> both TCs on v7x
        ),
        cost_estimate=pl.CostEstimate(
            flops=0,
            transcendentals=0,
            bytes_accessed=int(2 * n_pad * d_pad * 4 + n_pad * 4),
        ),
    )(pos_padded, pe_use)

    return out[:n, :dim_model]


if __name__ == "__main__":
    # Main check: lane-dense dim_model (multiple of 128), random (non-contiguous)
    # positions, kernel path forced.
    dim_model = 128
    max_len = 64
    seq = 8

    pe = make_pe_table(dim_model, max_len)

    key = jax.random.PRNGKey(0)
    k_pos, k_pos2 = jax.random.split(key)
    pos = jax.random.randint(k_pos, (seq,), 0, max_len, dtype=jnp.int32)

    out = positional_encoding_forward(pe, pos, allow_fast_path=False)
    out = jax.block_until_ready(out)

    ref = pe[pos]  # same semantics as torch.index_select(pe, 1, pos).squeeze(0)
    assert out.shape == (seq, dim_model)
    assert out.dtype == jnp.float32
    np.testing.assert_allclose(np.asarray(out), np.asarray(ref), rtol=0, atol=0)

    # Padding path: dim_model not a multiple of 128, row count not a multiple of 8.
    pe_small = make_pe_table(32, max_len)
    pos_small = jax.random.randint(k_pos2, (13,), 0, max_len, dtype=jnp.int32)
    out_small = positional_encoding_forward(pe_small, pos_small, allow_fast_path=False)
    out_small = jax.block_until_ready(out_small)
    np.testing.assert_allclose(np.asarray(out_small), np.asarray(pe_small[pos_small]),
                               rtol=0, atol=0)

    # Contiguous fast path (plain slice, no gather kernel).
    pos_contig = jnp.arange(5, 5 + seq, dtype=jnp.int32)
    out_contig = positional_encoding_forward(pe, pos_contig)
    out_contig = jax.block_until_ready(out_contig)
    np.testing.assert_allclose(np.asarray(out_contig), np.asarray(pe[pos_contig]),
                               rtol=0, atol=0)

    print("KERNEL_OK")
</pallas_src>

<mosaic_0001>
module attributes {stable_mosaic.version = 11 : i64} {
  func.func @_gather_rows_kernel(%arg0: i32, %arg1: memref<8xi32, #tpu.memory_space<smem>>, %arg2: memref<64x128xf32, #tpu.memory_space<any>>, %arg3: memref<8x128xf32, #tpu.memory_space<vmem>>, %arg4: memref<1x!tpu.dma_semaphore, #tpu.memory_space<semaphore_mem>>) attributes {dimension_semantics = [#tpu.dimension_semantics<parallel>], iteration_bounds = array<i64: 1>, scalar_prefetch = 1 : i64, scratch_operands = 1 : i64, tpu.core_type = #tpu.core_type<tc>, window_params = [{}, {transform_indices = @transform_1, window_bounds = array<i64: 8, 128>}]} {
    %c8_i32 = arith.constant 8 : i32
    %0 = arith.muli %arg0, %c8_i32 : i32
    %c0_i32 = arith.constant 0 : i32
    %1 = arith.addi %0, %c0_i32 : i32
    %2 = arith.index_cast %1 : i32 to index
    %3 = memref.load %arg1[%2] : memref<8xi32, #tpu.memory_space<smem>>
    %c0_i32_0 = arith.constant 0 : i32
    %c0_i32_1 = arith.constant 0 : i32
    %4 = tpu.memref_slice %arg2[%3, %c0_i32_1] : memref<64x128xf32, #tpu.memory_space<any>> -> memref<1x128xf32, #tpu.memory_space<any>>
    %c0_i32_2 = arith.constant 0 : i32
    %5 = tpu.memref_slice %arg3[%c0_i32, %c0_i32_2] : memref<8x128xf32, #tpu.memory_space<vmem>> -> memref<1x128xf32, #tpu.memory_space<vmem>>
    %6 = tpu.memref_slice %arg4[%c0_i32_0] : memref<1x!tpu.dma_semaphore, #tpu.memory_space<semaphore_mem>> -> memref<1x!tpu.dma_semaphore, #tpu.memory_space<semaphore_mem>>
    %7 = tpu.memref_squeeze %6 : memref<1x!tpu.dma_semaphore, #tpu.memory_space<semaphore_mem>> -> memref<!tpu.dma_semaphore, #tpu.memory_space<semaphore_mem>>
    tpu.enqueue_dma source(%4 : memref<1x128xf32, #tpu.memory_space<any>>) target(%5 : memref<1x128xf32, #tpu.memory_space<vmem>>) target_semaphore(%7 : memref<!tpu.dma_semaphore, #tpu.memory_space<semaphore_mem>>)
    %c1_i32 = arith.constant 1 : i32
    %8 = arith.addi %0, %c1_i32 : i32
    %9 = arith.index_cast %8 : i32 to index
    %10 = memref.load %arg1[%9] : memref<8xi32, #tpu.memory_space<smem>>
    %c0_i32_3 = arith.constant 0 : i32
    %c0_i32_4 = arith.constant 0 : i32
    %11 = tpu.memref_slice %arg2[%10, %c0_i32_4] : memref<64x128xf32, #tpu.memory_space<any>> -> memref<1x128xf32, #tpu.memory_space<any>>
    %c0_i32_5 = arith.constant 0 : i32
    %12 = tpu.memref_slice %arg3[%c1_i32, %c0_i32_5] : memref<8x128xf32, #tpu.memory_space<vmem>> -> memref<1x128xf32, #tpu.memory_space<vmem>>
    %13 = tpu.memref_slice %arg4[%c0_i32_3] : memref<1x!tpu.dma_semaphore, #tpu.memory_space<semaphore_mem>> -> memref<1x!tpu.dma_semaphore, #tpu.memory_space<semaphore_mem>>
    %14 = tpu.memref_squeeze %13 : memref<1x!tpu.dma_semaphore, #tpu.memory_space<semaphore_mem>> -> memref<!tpu.dma_semaphore, #tpu.memory_space<semaphore_mem>>
    tpu.enqueue_dma source(%11 : memref<1x128xf32, #tpu.memory_space<any>>) target(%12 : memref<1x128xf32, #tpu.memory_space<vmem>>) target_semaphore(%14 : memref<!tpu.dma_semaphore, #tpu.memory_space<semaphore_mem>>)
    %c2_i32 = arith.constant 2 : i32
    %15 = arith.addi %0, %c2_i32 : i32
    %16 = arith.index_cast %15 : i32 to index
    %17 = memref.load %arg1[%16] : memref<8xi32, #tpu.memory_space<smem>>
    %c0_i32_6 = arith.constant 0 : i32
    %c0_i32_7 = arith.constant 0 : i32
    %18 = tpu.memref_slice %arg2[%17, %c0_i32_7] : memref<64x128xf32, #tpu.memory_space<any>> -> memref<1x128xf32, #tpu.memory_space<any>>
    %c0_i32_8 = arith.constant 0 : i32
    %19 = tpu.memref_slice %arg3[%c2_i32, %c0_i32_8] : memref<8x128xf32, #tpu.memory_space<vmem>> -> memref<1x128xf32, #tpu.memory_space<vmem>>
    %20 = tpu.memref_slice %arg4[%c0_i32_6] : memref<1x!tpu.dma_semaphore, #tpu.memory_space<semaphore_mem>> -> memref<1x!tpu.dma_semaphore, #tpu.memory_space<semaphore_mem>>
    %21 = tpu.memref_squeeze %20 : memref<1x!tpu.dma_semaphore, #tpu.memory_space<semaphore_mem>> -> memref<!tpu.dma_semaphore, #tpu.memory_space<semaphore_mem>>
    tpu.enqueue_dma source(%18 : memref<1x128xf32, #tpu.memory_space<any>>) target(%19 : memref<1x128xf32, #tpu.memory_space<vmem>>) target_semaphore(%21 : memref<!tpu.dma_semaphore, #tpu.memory_space<semaphore_mem>>)
    %c3_i32 = arith.constant 3 : i32
    %22 = arith.addi %0, %c3_i32 : i32
    %23 = arith.index_cast %22 : i32 to index
    %24 = memref.load %arg1[%23] : memref<8xi32, #tpu.memory_space<smem>>
    %c0_i32_9 = arith.constant 0 : i32
    %c0_i32_10 = arith.constant 0 : i32
    %25 = tpu.memref_slice %arg2[%24, %c0_i32_10] : memref<64x128xf32, #tpu.memory_space<any>> -> memref<1x128xf32, #tpu.memory_space<any>>
    %c0_i32_11 = arith.constant 0 : i32
    %26 = tpu.memref_slice %arg3[%c3_i32, %c0_i32_11] : memref<8x128xf32, #tpu.memory_space<vmem>> -> memref<1x128xf32, #tpu.memory_space<vmem>>
    %27 = tpu.memref_slice %arg4[%c0_i32_9] : memref<1x!tpu.dma_semaphore, #tpu.memory_space<semaphore_mem>> -> memref<1x!tpu.dma_semaphore, #tpu.memory_space<semaphore_mem>>
    %28 = tpu.memref_squeeze %27 : memref<1x!tpu.dma_semaphore, #tpu.memory_space<semaphore_mem>> -> memref<!tpu.dma_semaphore, #tpu.memory_space<semaphore_mem>>
    tpu.enqueue_dma source(%25 : memref<1x128xf32, #tpu.memory_space<any>>) target(%26 : memref<1x128xf32, #tpu.memory_space<vmem>>) target_semaphore(%28 : memref<!tpu.dma_semaphore, #tpu.memory_space<semaphore_mem>>)
    %c4_i32 = arith.constant 4 : i32
    %29 = arith.addi %0, %c4_i32 : i32
    %30 = arith.index_cast %29 : i32 to index
    %31 = memref.load %arg1[%30] : memref<8xi32, #tpu.memory_space<smem>>
    %c0_i32_12 = arith.constant 0 : i32
    %c0_i32_13 = arith.constant 0 : i32
    %32 = tpu.memref_slice %arg2[%31, %c0_i32_13] : memref<64x128xf32, #tpu.memory_space<any>> -> memref<1x128xf32, #tpu.memory_space<any>>
    %c0_i32_14 = arith.constant 0 : i32
    %33 = tpu.memref_slice %arg3[%c4_i32, %c0_i32_14] : memref<8x128xf32, #tpu.memory_space<vmem>> -> memref<1x128xf32, #tpu.memory_space<vmem>>
    %34 = tpu.memref_slice %arg4[%c0_i32_12] : memref<1x!tpu.dma_semaphore, #tpu.memory_space<semaphore_mem>> -> memref<1x!tpu.dma_semaphore, #tpu.memory_space<semaphore_mem>>
    %35 = tpu.memref_squeeze %34 : memref<1x!tpu.dma_semaphore, #tpu.memory_space<semaphore_mem>> -> memref<!tpu.dma_semaphore, #tpu.memory_space<semaphore_mem>>
    tpu.enqueue_dma source(%32 : memref<1x128xf32, #tpu.memory_space<any>>) target(%33 : memref<1x128xf32, #tpu.memory_space<vmem>>) target_semaphore(%35 : memref<!tpu.dma_semaphore, #tpu.memory_space<semaphore_mem>>)
    %c5_i32 = arith.constant 5 : i32
    %36 = arith.addi %0, %c5_i32 : i32
    %37 = arith.index_cast %36 : i32 to index
    %38 = memref.load %arg1[%37] : memref<8xi32, #tpu.memory_space<smem>>
    %c0_i32_15 = arith.constant 0 : i32
    %c0_i32_16 = arith.constant 0 : i32
    %39 = tpu.memref_slice %arg2[%38, %c0_i32_16] : memref<64x128xf32, #tpu.memory_space<any>> -> memref<1x128xf32, #tpu.memory_space<any>>
    %c0_i32_17 = arith.constant 0 : i32
    %40 = tpu.memref_slice %arg3[%c5_i32, %c0_i32_17] : memref<8x128xf32, #tpu.memory_space<vmem>> -> memref<1x128xf32, #tpu.memory_space<vmem>>
    %41 = tpu.memref_slice %arg4[%c0_i32_15] : memref<1x!tpu.dma_semaphore, #tpu.memory_space<semaphore_mem>> -> memref<1x!tpu.dma_semaphore, #tpu.memory_space<semaphore_mem>>
    %42 = tpu.memref_squeeze %41 : memref<1x!tpu.dma_semaphore, #tpu.memory_space<semaphore_mem>> -> memref<!tpu.dma_semaphore, #tpu.memory_space<semaphore_mem>>
    tpu.enqueue_dma source(%39 : memref<1x128xf32, #tpu.memory_space<any>>) target(%40 : memref<1x128xf32, #tpu.memory_space<vmem>>) target_semaphore(%42 : memref<!tpu.dma_semaphore, #tpu.memory_space<semaphore_mem>>)
    %c6_i32 = arith.constant 6 : i32
    %43 = arith.addi %0, %c6_i32 : i32
    %44 = arith.index_cast %43 : i32 to index
    %45 = memref.load %arg1[%44] : memref<8xi32, #tpu.memory_space<smem>>
    %c0_i32_18 = arith.constant 0 : i32
    %c0_i32_19 = arith.constant 0 : i32
    %46 = tpu.memref_slice %arg2[%45, %c0_i32_19] : memref<64x128xf32, #tpu.memory_space<any>> -> memref<1x128xf32, #tpu.memory_space<any>>
    %c0_i32_20 = arith.constant 0 : i32
    %47 = tpu.memref_slice %arg3[%c6_i32, %c0_i32_20] : memref<8x128xf32, #tpu.memory_space<vmem>> -> memref<1x128xf32, #tpu.memory_space<vmem>>
    %48 = tpu.memref_slice %arg4[%c0_i32_18] : memref<1x!tpu.dma_semaphore, #tpu.memory_space<semaphore_mem>> -> memref<1x!tpu.dma_semaphore, #tpu.memory_space<semaphore_mem>>
    %49 = tpu.memref_squeeze %48 : memref<1x!tpu.dma_semaphore, #tpu.memory_space<semaphore_mem>> -> memref<!tpu.dma_semaphore, #tpu.memory_space<semaphore_mem>>
    tpu.enqueue_dma source(%46 : memref<1x128xf32, #tpu.memory_space<any>>) target(%47 : memref<1x128xf32, #tpu.memory_space<vmem>>) target_semaphore(%49 : memref<!tpu.dma_semaphore, #tpu.memory_space<semaphore_mem>>)
    %c7_i32 = arith.constant 7 : i32
    %50 = arith.addi %0, %c7_i32 : i32
    %51 = arith.index_cast %50 : i32 to index
    %52 = memref.load %arg1[%51] : memref<8xi32, #tpu.memory_space<smem>>
    %c0_i32_21 = arith.constant 0 : i32
    %c0_i32_22 = arith.constant 0 : i32
    %53 = tpu.memref_slice %arg2[%52, %c0_i32_22] : memref<64x128xf32, #tpu.memory_space<any>> -> memref<1x128xf32, #tpu.memory_space<any>>
    %c0_i32_23 = arith.constant 0 : i32
    %54 = tpu.memref_slice %arg3[%c7_i32, %c0_i32_23] : memref<8x128xf32, #tpu.memory_space<vmem>> -> memref<1x128xf32, #tpu.memory_space<vmem>>
    %55 = tpu.memref_slice %arg4[%c0_i32_21] : memref<1x!tpu.dma_semaphore, #tpu.memory_space<semaphore_mem>> -> memref<1x!tpu.dma_semaphore, #tpu.memory_space<semaphore_mem>>
    %56 = tpu.memref_squeeze %55 : memref<1x!tpu.dma_semaphore, #tpu.memory_space<semaphore_mem>> -> memref<!tpu.dma_semaphore, #tpu.memory_space<semaphore_mem>>
    tpu.enqueue_dma source(%53 : memref<1x128xf32, #tpu.memory_space<any>>) target(%54 : memref<1x128xf32, #tpu.memory_space<vmem>>) target_semaphore(%56 : memref<!tpu.dma_semaphore, #tpu.memory_space<semaphore_mem>>)
    %c8_i32_24 = arith.constant 8 : i32
    %c0_i32_25 = arith.constant 0 : i32
    %c8_i32_26 = arith.constant 8 : i32
    %57 = arith.addi %c0_i32_25, %c8_i32_26 : i32
    %c1_i32_27 = arith.constant 1 : i32
    scf.for %arg5 = %c0_i32_25 to %57 step %c1_i32_27  : i32 {
      %c0_i32_28 = arith.constant 0 : i32
      %c0_i32_29 = arith.constant 0 : i32
      %c0_i32_30 = arith.constant 0 : i32
      %58 = tpu.memref_slice %arg2[%c0_i32_29, %c0_i32_30] : memref<64x128xf32, #tpu.memory_space<any>> -> memref<1x128xf32, #tpu.memory_space<any>>
      %c0_i32_31 = arith.constant 0 : i32
      %c0_i32_32 = arith.constant 0 : i32
      %59 = tpu.memref_slice %arg3[%c0_i32_31, %c0_i32_32] : memref<8x128xf32, #tpu.memory_space<vmem>> -> memref<1x128xf32, #tpu.memory_space<vmem>>
      %60 = tpu.memref_slice %arg4[%c0_i32_28] : memref<1x!tpu.dma_semaphore, #tpu.memory_space<semaphore_mem>> -> memref<1x!tpu.dma_semaphore, #tpu.memory_space<semaphore_mem>>
      %61 = tpu.memref_squeeze %60 : memref<1x!tpu.dma_semaphore, #tpu.memory_space<semaphore_mem>> -> memref<!tpu.dma_semaphore, #tpu.memory_space<semaphore_mem>>
      tpu.wait_dma2 semaphore(%61 : memref<!tpu.dma_semaphore, #tpu.memory_space<semaphore_mem>>) src(%58 : memref<1x128xf32, #tpu.memory_space<any>>) dst(%59 : memref<1x128xf32, #tpu.memory_space<vmem>>)
    }
    return
  }
  func.func @transform_1(%arg0: i32, %arg1: memref<8xi32, #tpu.memory_space<smem>>) -> (i32, i32) {
    %c0_i32 = arith.constant 0 : i32
    %c0_i32_0 = arith.constant 0 : i32
    return %arg0, %c0_i32 : i32, i32
  }
}

</mosaic_0001>

<llo_original>
// kernel: tpu_custom_call.1
$region0: #{tpu_custom_call.1}
  #allocation0 [shape = 'u32[]', space=smem, size = 0x4, offset = 0x4, fixed_abs, tag = 'smem constant byte address 0x4 - core index']
  #allocation1 [shape = 'u32[144,128]{1,0:T(1,128)}', space=vmem, size = 0x12000, scoped, tag = 'internal scratch']
  #allocation2 [shape = 's32[1]{0}', space=sflag, size = 0x4, scoped, tag = 'scratch operand']
  #allocation3 [shape = 's32[1]{0}', space=sflag, size = 0x4, scoped, tag = 'scoped memory for tpu_custom_call.1']
  #allocation4 [shape = 'u8[512]{0}', space=smem, size = 0x200, scoped, tag = 'prefetched SMEM operand 0']
  #allocation7 [shape = 's32[]', space=sflag, size = 0x4, offset = 0, fixed_abs, tag = 'sflag constant byte address 0x0 - dummy sync flag']
  #allocation8 [shape = 's32[]', space=sflag, size = 0x4, offset = 0, fixed_abs, tag = 'sflag constant byte address 0x0 - dummy sync flag']
  #allocation9 [shape = 'u32[]', space=smem, size = 0x4, offset = 0x44, fixed_abs, tag = 'smem constant byte address 0x44 - assertion arg 0']
  #allocation10 [shape = 'u32[]', space=smem, size = 0x4, offset = 0x48, fixed_abs, tag = 'smem constant byte address 0x48 - assertion arg 1']
  #allocation11 [shape = 's32[]', space=sflag, size = 0x4, offset = 0, fixed_abs, tag = 'sflag constant byte address 0x0 - dummy sync flag']
  #allocation12 [shape = 's32[]', space=sflag, size = 0x4, offset = 0, fixed_abs, tag = 'sflag constant byte address 0x0 - dummy sync flag']
  #allocation13 [shape = 's32[]', space=sflag, size = 0x4, offset = 0, fixed_abs, tag = 'sflag constant byte address 0x0 - dummy sync flag']
  #allocation14 [shape = 's32[]', space=sflag, size = 0x4, offset = 0, fixed_abs, tag = 'sflag constant byte address 0x0 - dummy sync flag']
  #allocation15 [shape = 's32[]', space=sflag, size = 0x4, offset = 0, fixed_abs, tag = 'sflag constant byte address 0x0 - dummy sync flag']
  #allocation16 [shape = 's32[]', space=sflag, size = 0x4, offset = 0, fixed_abs, tag = 'sflag constant byte address 0x0 - dummy sync flag']
  #allocation17 [shape = 's32[]', space=sflag, size = 0x4, offset = 0, fixed_abs, tag = 'sflag constant byte address 0x0 - dummy sync flag']
  #allocation18 [shape = 's32[]', space=sflag, size = 0x4, offset = 0, fixed_abs, tag = 'sflag constant byte address 0x0 - dummy sync flag']
  #allocation19 [shape = 's32[]', space=sflag, size = 0x4, offset = 0, fixed_abs, tag = 'sflag constant byte address 0x0 - dummy sync flag']
  #allocation20 [shape = 's32[]', space=sflag, size = 0x4, offset = 0, fixed_abs, tag = 'sflag constant byte address 0x0 - dummy sync flag']
  #allocation21 [shape = 's32[]', space=sflag, size = 0x4, offset = 0, fixed_abs, tag = 'sflag constant byte address 0x0 - dummy sync flag']
  #allocation22 [shape = 's32[]', space=sflag, size = 0x4, offset = 0, fixed_abs, tag = 'sflag constant byte address 0x0 - dummy sync flag']
  #allocation23 [shape = 's32[]', space=sflag, size = 0x4, offset = 0, fixed_abs, tag = 'sflag constant byte address 0x0 - dummy sync flag']
  #allocation24 [shape = 's32[]', space=sflag, size = 0x4, offset = 0, fixed_abs, tag = 'sflag constant byte address 0x0 - dummy sync flag']
  %s0 = inlined_call_operand.hbm [shape: s32[8], index: 0, kind: input, shape index: {}]
  %s1 = inlined_call_operand.hbm [shape: f32[64,128], index: 1, kind: input, shape index: {}]
  %s2 = inlined_call_operand.hbm [shape: f32[8,128], index: 2, kind: output, shape index: {}]
  %s3 = sld [smem:[#allocation0]]
  $region49: #{tpu_custom_call.1} parent=0
    _
  %s5 = ssub.s32 1, %s3
  %s6 = scalar_select 0, %s5, %s3
  %8 = dma.hbm_to_smem %s0, 16, [#allocation4], [#allocation3]
  %9 = dma.done [#allocation3], 16
  %10 = sfence
  $region1: #{tpu_custom_call.1} parent=0
    #allocation5 [shape = 'u8[4096]{0}', space=vmem, size = 0x1000, scoped, tag = 'output window, operand 0, single buffered']
    #allocation6 [shape = 's32[1]{0}', space=sflag, size = 0x4, scoped, tag = 'scoped memory for tpu_custom_call.1']
    %11 = vsyncpa [#allocation6], 0
    %s12 = smul.u32 0, 8
    %s13 = sld [smem:[#allocation4 + %s12]]
    %s14 = smul.addr %s13, 16
    %s15 = scalar_lea.hbm %s1, %s14
    // Predicated region
    $region2: #{tpu_custom_call.1} parent=1 // pred_check
      _
    $region3: #{tpu_custom_call.1} parent=1 // pred_check_branch
      %17 = sbr.rel target = $region5
    $region4: #{tpu_custom_call.1} parent=1 // pred_region
      %18 = sst [smem:[#allocation9]] [#allocation8]
      %19 = sst [smem:[#allocation10]] [#allocation7]
    $region5: #{tpu_custom_call.1} parent=1 // pred_fallthru
      _
    %21 = shalt.err (0)
    %s23 = sshll.u32 [#allocation5], 4
    %s24 = int_to_ptr.vmem [resolvable:$true] %s23
    %26 = dma.hbm_to_vmem [thread:$0]  %s15, 16, %s24, [#allocation2]
    %s27 = sadd.s32 %s12, 1
    %s28 = sld [smem:[#allocation4 + %s27]]
    %s29 = smul.addr %s28, 16
    %s30 = scalar_lea.hbm %s1, %s29
    %s31 = scalar_lea.vmem [#allocation5], 1
    // Predicated region
    $region6: #{tpu_custom_call.1} parent=1 // pred_check
      _
    $region7: #{tpu_custom_call.1} parent=1 // pred_check_branch
      %33 = sbr.rel target = $region9
    $region8: #{tpu_custom_call.1} parent=1 // pred_region
      %34 = sst [smem:[#allocation9]] [#allocation12]
      %35 = sst [smem:[#allocation10]] [#allocation11]
    $region9: #{tpu_custom_call.1} parent=1 // pred_fallthru
      _
    %37 = shalt.err (0)
    %s39 = sshll.u32 %s31, 4
    %s40 = int_to_ptr.vmem [resolvable:$true] %s39
    %42 = dma.hbm_to_vmem [thread:$0]  %s30, 16, %s40, [#allocation2]
    %s43 = sadd.s32 %s12, 2
    %s44 = sld [smem:[#allocation4 + %s43]]
    %s45 = smul.addr %s44, 16
    %s46 = scalar_lea.hbm %s1, %s45
    %s47 = scalar_lea.vmem [#allocation5], 2
    // Predicated region
    $region10: #{tpu_custom_call.1} parent=1 // pred_check
      _
    $region11: #{tpu_custom_call.1} parent=1 // pred_check_branch
      %49 = sbr.rel target = $region13
    $region12: #{tpu_custom_call.1} parent=1 // pred_region
      %50 = sst [smem:[#allocation9]] [#allocation14]
      %51 = sst [smem:[#allocation10]] [#allocation13]
    $region13: #{tpu_custom_call.1} parent=1 // pred_fallthru
      _
    %53 = shalt.err (0)
    %s55 = sshll.u32 %s47, 4
    %s56 = int_to_ptr.vmem [resolvable:$true] %s55
    %58 = dma.hbm_to_vmem [thread:$0]  %s46, 16, %s56, [#allocation2]
    %s59 = sadd.s32 %s12, 3
    %s60 = sld [smem:[#allocation4 + %s59]]
    %s61 = smul.addr %s60, 16
    %s62 = scalar_lea.hbm %s1, %s61
    %s63 = scalar_lea.vmem [#allocation5], 3
    // Predicated region
    $region14: #{tpu_custom_call.1} parent=1 // pred_check
      _
    $region15: #{tpu_custom_call.1} parent=1 // pred_check_branch
      %65 = sbr.rel target = $region17
    $region16: #{tpu_custom_call.1} parent=1 // pred_region
      %66 = sst [smem:[#allocation9]] [#allocation16]
      %67 = sst [smem:[#allocation10]] [#allocation15]
    $region17: #{tpu_custom_call.1} parent=1 // pred_fallthru
      _
    %69 = shalt.err (0)
    %s71 = sshll.u32 %s63, 4
    %s72 = int_to_ptr.vmem [resolvable:$true] %s71
    %74 = dma.hbm_to_vmem [thread:$0]  %s62, 16, %s72, [#allocation2]
    %s75 = sadd.s32 %s12, 4
    %s76 = sld [smem:[#allocation4 + %s75]]
    %s77 = smul.addr %s76, 16
    %s78 = scalar_lea.hbm %s1, %s77
    %s79 = scalar_lea.vmem [#allocation5], 4
    // Predicated region
    $region18: #{tpu_custom_call.1} parent=1 // pred_check
      _
    $region19: #{tpu_custom_call.1} parent=1 // pred_check_branch
      %81 = sbr.rel target = $region21
    $region20: #{tpu_custom_call.1} parent=1 // pred_region
      %82 = sst [smem:[#allocation9]] [#allocation18]
      %83 = sst [smem:[#allocation10]] [#allocation17]
    $region21: #{tpu_custom_call.1} parent=1 // pred_fallthru
      _
    %85 = shalt.err (0)
    %s87 = sshll.u32 %s79, 4
    %s88 = int_to_ptr.vmem [resolvable:$true] %s87
    %90 = dma.hbm_to_vmem [thread:$0]  %s78, 16, %s88, [#allocation2]
    %s91 = sadd.s32 %s12, 5
    %s92 = sld [smem:[#allocation4 + %s91]]
    %s93 = smul.addr %s92, 16
    %s94 = scalar_lea.hbm %s1, %s93
    %s95 = scalar_lea.vmem [#allocation5], 5
    // Predicated region
    $region22: #{tpu_custom_call.1} parent=1 // pred_check
      _
    $region23: #{tpu_custom_call.1} parent=1 // pred_check_branch
      %97 = sbr.rel target = $region25
    $region24: #{tpu_custom_call.1} parent=1 // pred_region
      %98 = sst [smem:[#allocation9]] [#allocation20]
      %99 = sst [smem:[#allocation10]] [#allocation19]
    $region25: #{tpu_custom_call.1} parent=1 // pred_fallthru
      _
    %101 = shalt.err (0)
    %s103 = sshll.u32 %s95, 4
    %s104 = int_to_ptr.vmem [resolvable:$true] %s103
    %106 = dma.hbm_to_vmem [thread:$0]  %s94, 16, %s104, [#allocation2]
    %s107 = sadd.s32 %s12, 6
    %s108 = sld [smem:[#allocation4 + %s107]]
    %s109 = smul.addr %s108, 16
    %s110 = scalar_lea.hbm %s1, %s109
    %s111 = scalar_lea.vmem [#allocation5], 6
    // Predicated region
    $region26: #{tpu_custom_call.1} parent=1 // pred_check
      _
    $region27: #{tpu_custom_call.1} parent=1 // pred_check_branch
      %113 = sbr.rel target = $region29
    $region28: #{tpu_custom_call.1} parent=1 // pred_region
      %114 = sst [smem:[#allocation9]] [#allocation22]
      %115 = sst [smem:[#allocation10]] [#allocation21]
    $region29: #{tpu_custom_call.1} parent=1 // pred_fallthru
      _
    %117 = shalt.err (0)
    %s119 = sshll.u32 %s111, 4
    %s120 = int_to_ptr.vmem [resolvable:$true] %s119
    %122 = dma.hbm_to_vmem [thread:$0]  %s110, 16, %s120, [#allocation2]
    %s123 = sadd.s32 %s12, 7
    %s124 = sld [smem:[#allocation4 + %s123]]
    %s125 = smul.addr %s124, 16
    %s126 = scalar_lea.hbm %s1, %s125
    %s127 = scalar_lea.vmem [#allocation5], 7
    // Predicated region
    $region30: #{tpu_custom_call.1} parent=1 // pred_check
      _
    $region31: #{tpu_custom_call.1} parent=1 // pred_check_branch
      %129 = sbr.rel target = $region33
    $region32: #{tpu_custom_call.1} parent=1 // pred_region
      %130 = sst [smem:[#allocation9]] [#allocation24]
      %131 = sst [smem:[#allocation10]] [#allocation23]
    $region33: #{tpu_custom_call.1} parent=1 // pred_fallthru
      _
    %133 = shalt.err (0)
    %s135 = sshll.u32 %s127, 4
    %s136 = int_to_ptr.vmem [resolvable:$true] %s135
    %138 = dma.hbm_to_vmem [thread:$0]  %s126, 16, %s136, [#allocation2]
    loop: start=0, step=1, limit=8
    $region34: #{tpu_custom_call.1} parent=1 // loop_pre_header
      _
    $region35: #{tpu_custom_call.1} parent=1 // loop_header
      %s140 = sphi 0, %s144
      %p141 = scmp.ge.s32.totalorder %s140, 8
    $region36: #{tpu_custom_call.1} parent=1 // loop_header_branch
      %143 = sbr.rel (%p141) target = $region40
    $region37: #{tpu_custom_call.1} parent=1 // loop_body
      %s145 = smul.u32 1, 1
      %s146 = sshll.u32 %s145, 4
      %147 = dma.done [#allocation2], %s146
    $region38: #{tpu_custom_call.1} parent=1 // loop_footer
      %s144 = sadd.s32 1, %s140
    $region39: #{tpu_custom_call.1} parent=1 // loop_footer_branch
      %139 = sbr.rel target = $region35
    $region40: #{tpu_custom_call.1} parent=1 // loop_exit
      _
    // Predicated region
    $region41: #{tpu_custom_call.1} parent=1 // pred_check
      _
    $region42: #{tpu_custom_call.1} parent=1 // pred_check_branch
      %149 = sbr.rel (0) target = $region44
    $region43: #{tpu_custom_call.1} parent=1 // pred_region
      %s151 = ssub.s32 128, 128
      %152 = vsyncadd [#allocation6], %s151
      %s154 = sshll.u32 [#allocation5], 4
      %s155 = int_to_ptr.vmem [resolvable:$true] %s154
      %157 = dma.vmem_to_hbm [thread:$0]  %s155, 128, %s2, [#allocation6]
    $region44: #{tpu_custom_call.1} parent=1 // pred_fallthru
      _
    // Predicated region
    $region45: #{tpu_custom_call.1} parent=1 // pred_check
      _
    $region46: #{tpu_custom_call.1} parent=1 // pred_check_branch
      %159 = sbr.rel (0) target = $region48
    $region47: #{tpu_custom_call.1} parent=1 // pred_region
      %160 = dma.done [#allocation6], 128
    $region48: #{tpu_custom_call.1} parent=1 // pred_fallthru
      _
    %161 = vsyncpa [#allocation6], 1
  %162 = vsyncmov [#allocation2]
  %s163 = vpop.sfrf %162
  %p164 = scmp.eq.s32.totalorder %s163, 0
  %p165 = pneg %p164
  %167 = shalt.err (%p165)

</llo_original>
